<compile_context>
chip_gen: v7x
topology: tpu7x:2x2x1
jax: 0.10.0
libtpu: 0.0.40
codegen_flags: <defaults>
</compile_context>

<pallas_src>
import functools
import math

import jax
import jax.numpy as jnp
from jax.experimental import pallas as pl
from jax.experimental.pallas import tpu as pltpu


DEFAULT_LANE_ALIGN = 256  # multiple of the 128-lane vreg; matches 2x256x256 MXU tiles


def _round_up(x: int, m: int) -> int:
    return ((x + m - 1) // m) * m


def _vmem_capacity_bytes() -> int:
    """Physical VMEM per TensorCore; falls back to 128 MiB if the query fails."""
    try:
        info = pltpu.get_tpu_info()
        cap = getattr(info, "vmem_capacity_bytes", None)
        if cap:
            return int(cap)
    except Exception:
        pass
    return 128 << 20


# --------------------------------------------------------------------------- #
# Kernel body
# --------------------------------------------------------------------------- #
def _transcoder_kernel(x_ref, w_enc_ref, b_enc_ref, w_dec_ref, b_dec_out_ref,
                       out_ref, hidden_ref, acc_ref):
    """One (row-tile, hidden-tile) step of the fused transcoder forward."""
    h = pl.program_id(1)

    @pl.when(h == 0)
    def _():
        # Seed the accumulator with the decoder output bias -> finalize is cast+store.
        acc_ref[...] = jnp.broadcast_to(b_dec_out_ref[...], acc_ref.shape)

    # Encoder: (TM, d_in) @ (d_in, TH) on the MXU, f32 accumulation + f32 bias/ReLU.
    hidden = jnp.maximum(
        jnp.dot(x_ref[...], w_enc_ref[...], preferred_element_type=jnp.float32)
        + b_enc_ref[...],
        0.0,
    )

    # Single cast reused for the store and the decoder matmul when dtypes match.
    hidden_c = hidden.astype(w_dec_ref.dtype)
    if jnp.dtype(hidden_ref.dtype) == jnp.dtype(w_dec_ref.dtype):
        hidden_ref[...] = hidden_c
    else:
        hidden_ref[...] = hidden.astype(hidden_ref.dtype)

    # Decoder partial sum: (TM, TH) @ (TH, d_out) accumulated in f32 scratch.
    acc_ref[...] += jnp.dot(hidden_c, w_dec_ref[...],
                            preferred_element_type=jnp.float32)

    @pl.when(h == pl.num_programs(1) - 1)
    def _():
        out_ref[...] = acc_ref[...].astype(out_ref.dtype)


# --------------------------------------------------------------------------- #
# Parameter preparation (hoist padding / casting / bias fold out of the hot path)
# --------------------------------------------------------------------------- #
def prepare_transcoder_params(W_enc, b_enc, W_dec, b_dec, b_dec_out, *,
                              mxu_dtype=jnp.bfloat16, th_max=512,
                              lane_align=DEFAULT_LANE_ALIGN):
    """Pre-pad / pre-cast weights and fold `x - b_dec` into the encoder bias.

    Call this once per parameter set; the returned dict is reused by
    `transcoder_apply` for every forward call.
    """
    param_dtype = jnp.dtype(W_enc.dtype)
    compute_dtype = jnp.dtype(mxu_dtype) if mxu_dtype is not None else param_dtype

    d_in, d_hidden = W_enc.shape
    d_hidden2, d_out = W_dec.shape
    assert d_hidden2 == d_hidden, "W_enc / W_dec hidden dims disagree"

    d_in_p = _round_up(d_in, lane_align)
    d_out_p = _round_up(d_out, lane_align)
    TH = min(_round_up(th_max, lane_align), _round_up(d_hidden, lane_align))
    d_hidden_p = _round_up(d_hidden, TH)

    # Fold the `x - b_dec` subtraction into the encoder bias. Exact f32 matvec,
    # original-dtype W_enc operand (no d_in*d_hidden f32 temporary).
    b_enc_eff = (b_enc.astype(jnp.float32)
                 - jnp.dot(b_dec.reshape(1, d_in), W_enc,
                           preferred_element_type=jnp.float32,
                           precision=jax.lax.Precision.HIGHEST).reshape(d_hidden))

    W_enc_p = jnp.pad(W_enc.astype(compute_dtype),
                      ((0, d_in_p - d_in), (0, d_hidden_p - d_hidden)))
    W_dec_p = jnp.pad(W_dec.astype(compute_dtype),
                      ((0, d_hidden_p - d_hidden), (0, d_out_p - d_out)))
    b_enc_p = jnp.pad(b_enc_eff, (0, d_hidden_p - d_hidden)).reshape(1, d_hidden_p)
    b_dec_out_p = jnp.pad(b_dec_out.astype(jnp.float32),
                          (0, d_out_p - d_out)).reshape(1, d_out_p)

    return dict(
        W_enc=W_enc_p, b_enc=b_enc_p, W_dec=W_dec_p, b_dec_out=b_dec_out_p,
        d_in=d_in, d_hidden=d_hidden, d_out=d_out,
        d_in_p=d_in_p, d_hidden_p=d_hidden_p, d_out_p=d_out_p,
        TH=TH, lane_align=lane_align,
        compute_dtype=compute_dtype, param_dtype=param_dtype,
    )


# --------------------------------------------------------------------------- #
# Forward (per-call path)
# --------------------------------------------------------------------------- #
def transcoder_apply(prep, x, *, tm_max=None, hidden_dtype=None, out_dtype=None):
    """Run the fused transcoder forward with prepared (padded/cast) parameters.

    Returns (transcoder_out [..., d_out], hidden_activations [..., d_hidden]).
    """
    compute_dtype = prep["compute_dtype"]
    param_dtype = prep["param_dtype"]
    out_dtype = jnp.dtype(out_dtype) if out_dtype is not None else param_dtype
    hidden_dtype = jnp.dtype(hidden_dtype) if hidden_dtype is not None else param_dtype

    d_in, d_hidden, d_out = prep["d_in"], prep["d_hidden"], prep["d_out"]
    d_in_p, d_hidden_p, d_out_p = prep["d_in_p"], prep["d_hidden_p"], prep["d_out_p"]
    TH = prep["TH"]
    lane_align = prep["lane_align"]

    assert x.shape[-1] == d_in, f"expected last dim {d_in}, got {x.shape[-1]}"
    lead_shape = x.shape[:-1]
    rows = int(math.prod(lead_shape)) if lead_shape else 1

    # ---- Generation-aware tile sizes / VMEM budget. ----
    vmem_cap = _vmem_capacity_bytes()
    small_vmem = vmem_cap <= (80 << 20)            # v7x-class (64 MiB / TC)

    if tm_max is None:
        tm_max = 512 if small_vmem else 1024       # keeps weight streaming MXU-bound

    csz = jnp.dtype(compute_dtype).itemsize
    hsz = jnp.dtype(hidden_dtype).itemsize
    osz = jnp.dtype(out_dtype).itemsize
    row_align = max(8, 32 // max(csz, 1))          # bf16 -> 16, f32 -> 8 sublane packing

    TM = min(_round_up(tm_max, row_align), _round_up(rows, row_align))

    # v7x has 2 TensorCores: keep >=2 row programs so megacore sharding has work.
    if small_vmem and rows > row_align and TM >= _round_up(rows, row_align):
        TM = _round_up((rows + 1) // 2, row_align)

    def vmem_need(tm, th):
        return (2 * (tm * d_in_p + d_in_p * th + th * d_out_p) * csz   # dbl-buf inputs
                + 2 * (th + d_out_p) * 4                               # f32 biases
                + 2 * (tm * th * hsz + tm * d_out_p * osz)             # dbl-buf outputs
                + tm * d_out_p * 4)                                    # f32 accumulator

    budget = max(vmem_cap - (16 << 20), 16 << 20)
    # Shrink TH first (keeps arithmetic intensity on weight bytes), then TM.
    while (vmem_need(TM, TH) > budget and TH >= 2 * lane_align
           and (TH // 2) % 128 == 0 and d_hidden_p % (TH // 2) == 0):
        TH //= 2
    while vmem_need(TM, TH) > budget and TM > 2 * row_align:
        TM = _round_up(TM // 2, row_align)

    rows_p = _round_up(rows, TM)
    grid = (rows_p // TM, d_hidden_p // TH)

    x2d = x.reshape(rows, d_in).astype(compute_dtype)
    x_p = jnp.pad(x2d, ((0, rows_p - rows), (0, d_in_p - d_in)))

    vmem_limit = int(min(max(vmem_need(TM, TH) * 5 // 4 + (4 << 20), 32 << 20),
                         vmem_cap - (8 << 20)))

    flops = 2 * rows_p * d_in_p * d_hidden_p + 2 * rows_p * d_hidden_p * d_out_p
    bytes_accessed = (csz * (rows_p * d_in_p
                             + grid[0] * (d_in_p * d_hidden_p + d_hidden_p * d_out_p))
                      + osz * rows_p * d_out_p + hsz * rows_p * d_hidden_p)
    cost = pl.CostEstimate(flops=int(flops), transcendentals=0,
                           bytes_accessed=int(bytes_accessed))

    out_p, hidden_p = pl.pallas_call(
        _transcoder_kernel,
        out_shape=(
            jax.ShapeDtypeStruct((rows_p, d_out_p), out_dtype),
            jax.ShapeDtypeStruct((rows_p, d_hidden_p), hidden_dtype),
        ),
        grid_spec=pltpu.PrefetchScalarGridSpec(
            num_scalar_prefetch=0,
            grid=grid,
            in_specs=[
                pl.BlockSpec((TM, d_in_p), lambda i, h: (i, 0)),      # x (resident over h)
                pl.BlockSpec((d_in_p, TH), lambda i, h: (0, h)),      # W_enc tile
                pl.BlockSpec((1, TH), lambda i, h: (0, h)),           # folded encoder bias
                pl.BlockSpec((TH, d_out_p), lambda i, h: (h, 0)),     # W_dec tile
                pl.BlockSpec((1, d_out_p), lambda i, h: (0, 0)),      # b_dec_out (resident)
            ],
            out_specs=(
                pl.BlockSpec((TM, d_out_p), lambda i, h: (i, 0)),     # out (accumulated)
                pl.BlockSpec((TM, TH), lambda i, h: (i, h)),          # hidden activations
            ),
            scratch_shapes=[pltpu.VMEM((TM, d_out_p), jnp.float32)],
        ),
        compiler_params=pltpu.CompilerParams(
            dimension_semantics=("parallel", "arbitrary"),
            vmem_limit_bytes=vmem_limit,
        ),
        cost_estimate=cost,
    )(x_p, prep["W_enc"], prep["b_enc"], prep["W_dec"], prep["b_dec_out"])

    transcoder_out = out_p[:rows, :d_out].reshape(*lead_shape, d_out)
    hidden_activations = hidden_p[:rows, :d_hidden].reshape(*lead_shape, d_hidden)
    return transcoder_out, hidden_activations


def transcoder_forward(x, W_enc, b_enc, W_dec, b_dec, b_dec_out, *,
                       mxu_dtype=jnp.bfloat16, tm_max=None, th_max=512,
                       hidden_dtype=None, out_dtype=None):
    """One-shot convenience wrapper: prepare params + apply.

    For repeated calls with the same parameters, call `prepare_transcoder_params`
    once and reuse the result with `transcoder_apply`.
    """
    prep = prepare_transcoder_params(W_enc, b_enc, W_dec, b_dec, b_dec_out,
                                     mxu_dtype=mxu_dtype, th_max=th_max)
    return transcoder_apply(prep, x, tm_max=tm_max,
                            hidden_dtype=hidden_dtype, out_dtype=out_dtype)


# --------------------------------------------------------------------------- #
# Parameter init (mirrors the PyTorch __init__) and correctness harness
# --------------------------------------------------------------------------- #
def init_transcoder_params(key, d_in, d_hidden, d_out, dtype=jnp.float32):
    k_enc, k_dec = jax.random.split(key)

    bound_enc = math.sqrt(6.0 / d_hidden)   # torch kaiming_uniform_ fan_in = size(1)
    W_enc = jax.random.uniform(k_enc, (d_in, d_hidden), dtype=jnp.float32,
                               minval=-bound_enc, maxval=bound_enc)

    bound_dec = math.sqrt(6.0 / d_out)
    W_dec = jax.random.uniform(k_dec, (d_hidden, d_out), dtype=jnp.float32,
                               minval=-bound_dec, maxval=bound_dec)
    W_dec = W_dec / jnp.linalg.norm(W_dec, axis=1, keepdims=True)

    return dict(
        W_enc=W_enc.astype(dtype),
        b_enc=jnp.zeros((d_hidden,), dtype),
        W_dec=W_dec.astype(dtype),
        b_dec=jnp.zeros((d_in,), dtype),
        b_dec_out=jnp.zeros((d_out,), dtype),
    )


def _reference_forward(x, p):
    tin = x.astype(p["W_enc"].dtype) - p["b_dec"]
    hidden = jax.nn.relu(tin @ p["W_enc"] + p["b_enc"])
    out = hidden @ p["W_dec"] + p["b_dec_out"]
    return out, hidden


def _check(out, hidden, ref_out, ref_hidden, tol):
    assert out.shape == ref_out.shape and hidden.shape == ref_hidden.shape
    assert jnp.allclose(out.astype(jnp.float32), ref_out, atol=tol, rtol=tol), (
        f"out mismatch (tol={tol}): max abs diff "
        f"{float(jnp.max(jnp.abs(out.astype(jnp.float32) - ref_out)))}")
    assert jnp.allclose(hidden.astype(jnp.float32), ref_hidden, atol=tol, rtol=tol), (
        f"hidden mismatch (tol={tol}): max abs diff "
        f"{float(jnp.max(jnp.abs(hidden.astype(jnp.float32) - ref_hidden)))}")


if __name__ == "__main__":
    key = jax.random.PRNGKey(0)
    k1, k2, k3 = jax.random.split(key, 3)

    # ---- Case 1: module-like small shapes, default bf16 MXU feeds, zero biases. ----
    d_in, d_hidden, d_out = 32, 64, 32
    params = init_transcoder_params(k1, d_in, d_hidden, d_out, dtype=jnp.float32)
    x = jax.random.normal(jax.random.fold_in(k1, 1), (2, 8, d_in), dtype=jnp.float32)
    out, hidden = transcoder_forward(
        x, params["W_enc"], params["b_enc"], params["W_dec"],
        params["b_dec"], params["b_dec_out"])
    jax.block_until_ready(out); jax.block_until_ready(hidden)
    ref_out, ref_hidden = _reference_forward(x, params)
    _check(out, hidden, ref_out, ref_hidden, tol=5e-2)

    # ---- Case 2: non-aligned dims, multi-tile grid (row-parallel + hidden reduction),
    #      nonzero biases, full-f32 MXU path (tight numerics). ----
    d_in, d_hidden, d_out = 96, 512, 80
    params = init_transcoder_params(k2, d_in, d_hidden, d_out, dtype=jnp.float32)
    kb = jax.random.split(jax.random.fold_in(k2, 7), 3)
    params["b_enc"] = 0.1 * jax.random.normal(kb[0], (d_hidden,), jnp.float32)
    params["b_dec"] = 0.1 * jax.random.normal(kb[1], (d_in,), jnp.float32)
    params["b_dec_out"] = 0.1 * jax.random.normal(kb[2], (d_out,), jnp.float32)
    x = jax.random.normal(jax.random.fold_in(k2, 1), (3, 10, d_in), dtype=jnp.float32)

    prep_f32 = prepare_transcoder_params(
        params["W_enc"], params["b_enc"], params["W_dec"],
        params["b_dec"], params["b_dec_out"],
        mxu_dtype=jnp.float32, th_max=256)
    out, hidden = transcoder_apply(prep_f32, x, tm_max=8)
    jax.block_until_ready(out); jax.block_until_ready(hidden)
    ref_out, ref_hidden = _reference_forward(x, params)
    _check(out, hidden, ref_out, ref_hidden, tol=5e-3)

    # ---- Case 3: same shapes, default bf16 MXU feeds + bf16 hidden writeback,
    #      prepared params reused under jax.jit. ----
    prep_bf16 = prepare_transcoder_params(
        params["W_enc"], params["b_enc"], params["W_dec"],
        params["b_dec"], params["b_dec_out"],
        mxu_dtype=jnp.bfloat16, th_max=256)
    fwd = jax.jit(functools.partial(transcoder_apply, prep_bf16,
                                    tm_max=16, hidden_dtype=jnp.bfloat16))
    out, hidden = fwd(x)
    jax.block_until_ready(out); jax.block_until_ready(hidden)
    _check(out, hidden, ref_out, ref_hidden, tol=5e-2)

    print("KERNEL_OK")
</pallas_src>

<mosaic_0001>
module attributes {stable_mosaic.version = 11 : i64} {
  func.func @_transcoder_kernel(%arg0: i32, %arg1: i32, %arg2: memref<16x256xbf16, #tpu.memory_space<vmem>>, %arg3: memref<256x256xbf16, #tpu.memory_space<vmem>>, %arg4: memref<1x256xf32, #tpu.memory_space<vmem>>, %arg5: memref<256x256xbf16, #tpu.memory_space<vmem>>, %arg6: memref<1x256xf32, #tpu.memory_space<vmem>>, %arg7: memref<16x256xf32, #tpu.memory_space<vmem>>, %arg8: memref<16x256xf32, #tpu.memory_space<vmem>>, %arg9: memref<16x256xf32, #tpu.memory_space<vmem>>) attributes {dimension_semantics = [#tpu.dimension_semantics<parallel>, #tpu.dimension_semantics<arbitrary>], iteration_bounds = array<i64: 1, 1>, scalar_prefetch = 0 : i64, scratch_operands = 1 : i64, tpu.core_type = #tpu.core_type<tc>, window_params = [{transform_indices = @transform_0, window_bounds = array<i64: 16, 256>}, {transform_indices = @transform_1, window_bounds = array<i64: 256, 256>}, {transform_indices = @transform_2, window_bounds = array<i64: 1, 256>}, {transform_indices = @transform_3, window_bounds = array<i64: 256, 256>}, {pipeline_mode = #tpu.pipeline_mode<synchronous>, transform_indices = @transform_4, window_bounds = array<i64: 1, 256>}, {transform_indices = @transform_5, window_bounds = array<i64: 16, 256>}, {transform_indices = @transform_6, window_bounds = array<i64: 16, 256>}]} {
    %c0_i32 = arith.constant 0 : i32
    %0 = arith.cmpi eq, %arg1, %c0_i32 : i32
    %1 = arith.extui %0 : i1 to i32
    %c0_i32_0 = arith.constant 0 : i32
    %2 = arith.cmpi ne, %1, %c0_i32_0 : i32
    scf.if %2 {
      %c0_18 = arith.constant 0 : index
      %c0_19 = arith.constant 0 : index
      %21 = vector.load %arg6[%c0_18, %c0_19] : memref<1x256xf32, #tpu.memory_space<vmem>>, vector<1x256xf32>
      %22 = vector.shape_cast %21 : vector<1x256xf32> to vector<1x256xf32>
      %23 = vector.broadcast %22 : vector<1x256xf32> to vector<16x256xf32>
      %c0_20 = arith.constant 0 : index
      %c0_21 = arith.constant 0 : index
      %24 = vector.load %arg9[%c0_20, %c0_21] : memref<16x256xf32, #tpu.memory_space<vmem>>, vector<16x256xf32>
      tpu.vector_store %arg9[%c0_20, %c0_21], %23 {strides = array<i32>} : memref<16x256xf32, #tpu.memory_space<vmem>>, vector<16x256xf32>,
    } else {
    }
    %c0 = arith.constant 0 : index
    %c0_1 = arith.constant 0 : index
    %3 = vector.load %arg2[%c0, %c0_1] : memref<16x256xbf16, #tpu.memory_space<vmem>>, vector<16x256xbf16>
    %c0_2 = arith.constant 0 : index
    %c0_3 = arith.constant 0 : index
    %4 = vector.load %arg3[%c0_2, %c0_3] : memref<256x256xbf16, #tpu.memory_space<vmem>>, vector<256x256xbf16>
    %cst = arith.constant dense<0.000000e+00> : vector<16x256xf32>
    %5 = tpu.matmul %3, %4, %cst {dimension_numbers = #tpu.dot_dimension_numbers<[1], [0], [0], [1], [0, 0, 1, 1], [], []>} : vector<16x256xbf16>, vector<256x256xbf16>, vector<16x256xf32> -> vector<16x256xf32>
    %c0_4 = arith.constant 0 : index
    %c0_5 = arith.constant 0 : index
    %6 = vector.load %arg4[%c0_4, %c0_5] : memref<1x256xf32, #tpu.memory_space<vmem>>, vector<1x256xf32>
    %7 = vector.broadcast %6 : vector<1x256xf32> to vector<16x256xf32>
    %8 = arith.addf %5, %7 : vector<16x256xf32>
    %cst_6 = arith.constant 0.000000e+00 : f32
    %9 = vector.broadcast %cst_6 : f32 to vector<16x256xf32>
    %10 = arith.maximumf %8, %9 : vector<16x256xf32>
    %11 = arith.truncf %10 : vector<16x256xf32> to vector<16x256xbf16>
    %c0_7 = arith.constant 0 : index
    %c0_8 = arith.constant 0 : index
    %12 = vector.load %arg8[%c0_7, %c0_8] : memref<16x256xf32, #tpu.memory_space<vmem>>, vector<16x256xf32>
    tpu.vector_store %arg8[%c0_7, %c0_8], %10 {strides = array<i32>} : memref<16x256xf32, #tpu.memory_space<vmem>>, vector<16x256xf32>,
    %c0_9 = arith.constant 0 : index
    %c0_10 = arith.constant 0 : index
    %13 = vector.load %arg9[%c0_9, %c0_10] : memref<16x256xf32, #tpu.memory_space<vmem>>, vector<16x256xf32>
    %c0_11 = arith.constant 0 : index
    %c0_12 = arith.constant 0 : index
    %14 = vector.load %arg5[%c0_11, %c0_12] : memref<256x256xbf16, #tpu.memory_space<vmem>>, vector<256x256xbf16>
    %cst_13 = arith.constant dense<0.000000e+00> : vector<16x256xf32>
    %15 = tpu.matmul %11, %14, %cst_13 {dimension_numbers = #tpu.dot_dimension_numbers<[1], [0], [0], [1], [0, 0, 1, 1], [], []>} : vector<16x256xbf16>, vector<256x256xbf16>, vector<16x256xf32> -> vector<16x256xf32>
    %16 = arith.addf %13, %15 : vector<16x256xf32>
    %c0_14 = arith.constant 0 : index
    %c0_15 = arith.constant 0 : index
    %17 = vector.load %arg9[%c0_14, %c0_15] : memref<16x256xf32, #tpu.memory_space<vmem>>, vector<16x256xf32>
    tpu.vector_store %arg9[%c0_14, %c0_15], %16 {strides = array<i32>} : memref<16x256xf32, #tpu.memory_space<vmem>>, vector<16x256xf32>,
    %c0_i32_16 = arith.constant 0 : i32
    %18 = arith.cmpi eq, %arg1, %c0_i32_16 : i32
    %19 = arith.extui %18 : i1 to i32
    %c0_i32_17 = arith.constant 0 : i32
    %20 = arith.cmpi ne, %19, %c0_i32_17 : i32
    scf.if %20 {
      %c0_18 = arith.constant 0 : index
      %c0_19 = arith.constant 0 : index
      %21 = vector.load %arg9[%c0_18, %c0_19] : memref<16x256xf32, #tpu.memory_space<vmem>>, vector<16x256xf32>
      %c0_20 = arith.constant 0 : index
      %c0_21 = arith.constant 0 : index
      %22 = vector.load %arg7[%c0_20, %c0_21] : memref<16x256xf32, #tpu.memory_space<vmem>>, vector<16x256xf32>
      tpu.vector_store %arg7[%c0_20, %c0_21], %21 {strides = array<i32>} : memref<16x256xf32, #tpu.memory_space<vmem>>, vector<16x256xf32>,
    } else {
    }
    return
  }
  func.func @transform_0(%arg0: i32, %arg1: i32) -> (i32, i32) {
    %c0_i32 = arith.constant 0 : i32
    %c0_i32_0 = arith.constant 0 : i32
    return %arg0, %c0_i32 : i32, i32
  }
  func.func @transform_1(%arg0: i32, %arg1: i32) -> (i32, i32) {
    %c0_i32 = arith.constant 0 : i32
    %c0_i32_0 = arith.constant 0 : i32
    return %c0_i32, %arg1 : i32, i32
  }
  func.func @transform_2(%arg0: i32, %arg1: i32) -> (i32, i32) {
    %c0_i32 = arith.constant 0 : i32
    %c0_i32_0 = arith.constant 0 : i32
    return %c0_i32, %arg1 : i32, i32
  }
  func.func @transform_3(%arg0: i32, %arg1: i32) -> (i32, i32) {
    %c0_i32 = arith.constant 0 : i32
    %c0_i32_0 = arith.constant 0 : i32
    return %arg1, %c0_i32 : i32, i32
  }
  func.func @transform_4(%arg0: i32, %arg1: i32) -> (i32, i32) {
    %c0_i32 = arith.constant 0 : i32
    %c0_i32_0 = arith.constant 0 : i32
    %c0_i32_1 = arith.constant 0 : i32
    return %c0_i32, %c0_i32_0 : i32, i32
  }
  func.func @transform_5(%arg0: i32, %arg1: i32) -> (i32, i32) {
    %c0_i32 = arith.constant 0 : i32
    %c0_i32_0 = arith.constant 0 : i32
    return %arg0, %c0_i32 : i32, i32
  }
  func.func @transform_6(%arg0: i32, %arg1: i32) -> (i32, i32) {
    %c0_i32 = arith.constant 0 : i32
    return %arg0, %arg1 : i32, i32
  }
}

</mosaic_0001>

<llo_original>
// kernel: tpu_custom_call.1
$region0: #{tpu_custom_call.1}
  #allocation0 [shape = 'u32[]', space=smem, size = 0x4, offset = 0x4, fixed_abs, tag = 'smem constant byte address 0x4 - core index']
  #allocation1 [shape = 'u32[144,128]{1,0:T(1,128)}', space=vmem, size = 0x12000, scoped, tag = 'internal scratch']
  #allocation2 [shape = 'f32[16,256]{1,0:T(8,128)}', space=vmem, size = 0x4000, scoped, tag = 'scratch operand']
  %s0 = inlined_call_operand.hbm [shape: bf16[16,256], index: 0, kind: input, shape index: {}]
  %s1 = inlined_call_operand.hbm [shape: bf16[256,256], index: 1, kind: input, shape index: {}]
  %s2 = inlined_call_operand.vmem [shape: f32[1,256], index: 2, kind: input, shape index: {}]
  %s3 = inlined_call_operand.hbm [shape: bf16[256,256], index: 3, kind: input, shape index: {}]
  %s4 = inlined_call_operand.vmem [shape: f32[1,256], index: 4, kind: input, shape index: {}]
  %s5 = inlined_call_operand.hbm [shape: f32[16,256], index: 5, kind: output, shape index: {0}]
  %s6 = inlined_call_operand.hbm [shape: f32[16,256], index: 6, kind: output, shape index: {1}]
  %7 = xla_tuple %s5, %s6
  %s8 = sld [smem:[#allocation0]]
  $region58: #{tpu_custom_call.1} parent=0
    _
  %s10 = ssub.s32 1, %s8
  %s11 = scalar_select 0, %s10, %s8
  $region1: #{tpu_custom_call.1} parent=0
    #allocation3 [shape = 'u8[8192]{0}', space=vmem, size = 0x2000, scoped, tag = 'input window, operand 0, single buffered']
    #allocation4 [shape = 's32[1]{0}', space=sflag, size = 0x4, scoped, tag = 'scoped memory for tpu_custom_call.1']
    #allocation5 [shape = 's32[1]{0}', space=sflag, size = 0x4, scoped, tag = 'scoped memory for tpu_custom_call.1']
    #allocation6 [shape = 'u8[131072]{0}', space=vmem, size = 0x20000, scoped, tag = 'input window, operand 1, single buffered']
    #allocation7 [shape = 's32[1]{0}', space=sflag, size = 0x4, scoped, tag = 'scoped memory for tpu_custom_call.1']
    #allocation8 [shape = 'u8[131072]{0}', space=vmem, size = 0x20000, scoped, tag = 'input window, operand 3, single buffered']
    #allocation9 [shape = 'u8[16384]{0}', space=vmem, size = 0x4000, scoped, tag = 'output window, operand 0, single buffered']
    #allocation10 [shape = 'u8[16384]{0}', space=vmem, size = 0x4000, scoped, tag = 'output window, operand 1, single buffered']
    #allocation11 [shape = 's32[1]{0}', space=sflag, size = 0x4, scoped, tag = 'scoped memory for tpu_custom_call.1']
    %12 = vsyncpa [#allocation4], 0
    %13 = vsyncpa [#allocation7], 0
    %14 = vsyncpa [#allocation5], 0
    %15 = vsyncpa [#allocation11], 0
    // Predicated region
    $region2: #{tpu_custom_call.1} parent=1 // pred_check
      _
    $region3: #{tpu_custom_call.1} parent=1 // pred_check_branch
      %17 = sbr.rel (0) target = $region5
    $region4: #{tpu_custom_call.1} parent=1 // pred_region
      %s19 = ssub.s32 256, 256
      %20 = vsyncadd [#allocation4], %s19
      %s21 = sshll.u32 [#allocation3], 4
      %s22 = int_to_ptr.vmem [resolvable:$true] %s21
      %27 = dma.hbm_to_vmem [thread:$0]  %s0, 256, %s22, [#allocation4], 128, 128, 8
    $region5: #{tpu_custom_call.1} parent=1 // pred_fallthru
      _
    // Predicated region
    $region6: #{tpu_custom_call.1} parent=1 // pred_check
      _
    $region7: #{tpu_custom_call.1} parent=1 // pred_check_branch
      %29 = sbr.rel (0) target = $region9
    $region8: #{tpu_custom_call.1} parent=1 // pred_region
      %s31 = ssub.s32 4096, 4096
      %32 = vsyncadd [#allocation7], %s31
      %s33 = sshll.u32 [#allocation6], 4
      %s34 = int_to_ptr.vmem [resolvable:$true] %s33
      %39 = dma.hbm_to_vmem [thread:$0]  %s1, 4096, %s34, [#allocation7], 128, 128, 8
    $region9: #{tpu_custom_call.1} parent=1 // pred_fallthru
      _
    // Predicated region
    $region10: #{tpu_custom_call.1} parent=1 // pred_check
      _
    $region11: #{tpu_custom_call.1} parent=1 // pred_check_branch
      %41 = sbr.rel (0) target = $region13
    $region12: #{tpu_custom_call.1} parent=1 // pred_region
      _
    $region13: #{tpu_custom_call.1} parent=1 // pred_fallthru
      _
    // Predicated region
    $region14: #{tpu_custom_call.1} parent=1 // pred_check
      _
    $region15: #{tpu_custom_call.1} parent=1 // pred_check_branch
      %43 = sbr.rel (0) target = $region17
    $region16: #{tpu_custom_call.1} parent=1 // pred_region
      %s45 = ssub.s32 4096, 4096
      %46 = vsyncadd [#allocation7], %s45
      %s47 = sshll.u32 [#allocation8], 4
      %s48 = int_to_ptr.vmem [resolvable:$true] %s47
      %53 = dma.hbm_to_vmem [thread:$0]  %s3, 4096, %s48, [#allocation7], 128, 128, 8
    $region17: #{tpu_custom_call.1} parent=1 // pred_fallthru
      _
    // Predicated region
    $region18: #{tpu_custom_call.1} parent=1 // pred_check
      _
    $region19: #{tpu_custom_call.1} parent=1 // pred_check_branch
      %55 = sbr.rel (0) target = $region21
    $region20: #{tpu_custom_call.1} parent=1 // pred_region
      _
    $region21: #{tpu_custom_call.1} parent=1 // pred_fallthru
      _
    // Predicated region
    $region22: #{tpu_custom_call.1} parent=1 // pred_check
      _
    $region23: #{tpu_custom_call.1} parent=1 // pred_check_branch
      %57 = sbr.rel (0) target = $region25
    $region24: #{tpu_custom_call.1} parent=1 // pred_region
      %58 = dma.done [#allocation4], 256
    $region25: #{tpu_custom_call.1} parent=1 // pred_fallthru
      _
    // Predicated region
    $region26: #{tpu_custom_call.1} parent=1 // pred_check
      _
    $region27: #{tpu_custom_call.1} parent=1 // pred_check_branch
      %60 = sbr.rel (0) target = $region29
    $region28: #{tpu_custom_call.1} parent=1 // pred_region
      %61 = dma.done [#allocation7], 4096
    $region29: #{tpu_custom_call.1} parent=1 // pred_fallthru
      _
    // Predicated region
    $region30: #{tpu_custom_call.1} parent=1 // pred_check
      _
    $region31: #{tpu_custom_call.1} parent=1 // pred_check_branch
      %63 = sbr.rel (0) target = $region33
    $region32: #{tpu_custom_call.1} parent=1 // pred_region
      %64 = dma.done [#allocation7], 4096
    $region33: #{tpu_custom_call.1} parent=1 // pred_fallthru
      _
    %p65 = scmp.eq.s32.totalorder 0, 0
    // Predicated region
    $region34: #{tpu_custom_call.1} parent=1 // pred_check
      %p66 = pneg %p65
    $region35: #{tpu_custom_call.1} parent=1 // pred_check_branch
      %68 = sbr.rel (%p66) target = $region37
    $region36: #{tpu_custom_call.1} parent=1 // pred_region
      %v69 = vld [vmem:[%s4] sm:$0x3]
      %v71 = vlaneseq
      %v72 = vshrl.u32 %v71, 7
      %v73 = vsub.s32 0, %v72
      %v74 = vrot.slane %v69, %v73
      %v75 = vlaneseq
      %v76 = vshrl.u32 %v75, 7
      %v77 = vsub.s32 1, %v76
      %v78 = vrot.slane %v69, %v77
      %81 = vst [vmem:[#allocation2] sm:$0xff] %v74
      %82 = vst [vmem:[#allocation2 + $0x8] sm:$0xff] %v78
      %83 = vst [vmem:[#allocation2 + $0x10] sm:$0xff] %v74
      %84 = vst [vmem:[#allocation2 + $0x18] sm:$0xff] %v78
    $region37: #{tpu_custom_call.1} parent=1 // pred_fallthru
      _
    %v85 = vld [vmem:[#allocation3] sm:$0xff]
    %v86 = vld [vmem:[#allocation3 + $0x8] sm:$0xff]
    %v87 = vld [vmem:[#allocation6] sm:$0xff]
    %v88 = vld [vmem:[#allocation6 + $0x8] sm:$0xff]
    %v89 = vld [vmem:[#allocation6 + $0x10] sm:$0xff]
    %v90 = vld [vmem:[#allocation6 + $0x18] sm:$0xff]
    %v91 = vld [vmem:[#allocation6 + $0x20] sm:$0xff]
    %v92 = vld [vmem:[#allocation6 + $0x28] sm:$0xff]
    %v93 = vld [vmem:[#allocation6 + $0x30] sm:$0xff]
    %v94 = vld [vmem:[#allocation6 + $0x38] sm:$0xff]
    %v95 = vld [vmem:[#allocation6 + $0x40] sm:$0xff]
    %v96 = vld [vmem:[#allocation6 + $0x48] sm:$0xff]
    %v97 = vld [vmem:[#allocation6 + $0x50] sm:$0xff]
    %v98 = vld [vmem:[#allocation6 + $0x58] sm:$0xff]
    %v99 = vld [vmem:[#allocation6 + $0x60] sm:$0xff]
    %v100 = vld [vmem:[#allocation6 + $0x68] sm:$0xff]
    %v101 = vld [vmem:[#allocation6 + $0x70] sm:$0xff]
    %v102 = vld [vmem:[#allocation6 + $0x78] sm:$0xff]
    %v103 = vld [vmem:[#allocation6 + $0x80] sm:$0xff]
    %v104 = vld [vmem:[#allocation6 + $0x88] sm:$0xff]
    %v105 = vld [vmem:[#allocation6 + $0x90] sm:$0xff]
    %v106 = vld [vmem:[#allocation6 + $0x98] sm:$0xff]
    %v107 = vld [vmem:[#allocation6 + $0xa0] sm:$0xff]
    %v108 = vld [vmem:[#allocation6 + $0xa8] sm:$0xff]
    %v109 = vld [vmem:[#allocation6 + $0xb0] sm:$0xff]
    %v110 = vld [vmem:[#allocation6 + $0xb8] sm:$0xff]
    %v111 = vld [vmem:[#allocation6 + $0xc0] sm:$0xff]
    %v112 = vld [vmem:[#allocation6 + $0xc8] sm:$0xff]
    %v113 = vld [vmem:[#allocation6 + $0xd0] sm:$0xff]
    %v114 = vld [vmem:[#allocation6 + $0xd8] sm:$0xff]
    %v115 = vld [vmem:[#allocation6 + $0xe0] sm:$0xff]
    %v116 = vld [vmem:[#allocation6 + $0xe8] sm:$0xff]
    %v117 = vld [vmem:[#allocation6 + $0xf0] sm:$0xff]
    %v118 = vld [vmem:[#allocation6 + $0xf8] sm:$0xff]
    %v119 = vld [vmem:[%s2] sm:$0x3]
    %v121 = vlaneseq
    %v122 = vshrl.u32 %v121, 7
    %v123 = vsub.s32 0, %v122
    %v124 = vrot.slane %v119, %v123
    %v125 = vlaneseq
    %v126 = vshrl.u32 %v125, 7
    %v127 = vsub.s32 1, %v126
    %v128 = vrot.slane %v119, %v127
    %v133 = vunpack.c.l.b16 %v85
    %v134 = vunpack.c.h.b16 %v85
    %v135 = vunpack.c.l.b16 %v86
    %v136 = vunpack.c.h.b16 %v86
    %v137 = vpack.c.b16 %v135, %v133
    %v138 = vpack.c.b16 %v136, %v134
    %v173 = vunpack.c.l.b16 %v87
    %v174 = vunpack.c.h.b16 %v87
    %v175 = vunpack.c.l.b16 %v88
    %v176 = vunpack.c.h.b16 %v88
    %v177 = vunpack.c.l.b16 %v89
    %v178 = vunpack.c.h.b16 %v89
    %v179 = vunpack.c.l.b16 %v90
    %v180 = vunpack.c.h.b16 %v90
    %v181 = vunpack.c.l.b16 %v91
    %v182 = vunpack.c.h.b16 %v91
    %v183 = vunpack.c.l.b16 %v92
    %v184 = vunpack.c.h.b16 %v92
    %v185 = vunpack.c.l.b16 %v93
    %v186 = vunpack.c.h.b16 %v93
    %v187 = vunpack.c.l.b16 %v94
    %v188 = vunpack.c.h.b16 %v94
    %v189 = vunpack.c.l.b16 %v95
    %v190 = vunpack.c.h.b16 %v95
    %v191 = vunpack.c.l.b16 %v96
    %v192 = vunpack.c.h.b16 %v96
    %v193 = vunpack.c.l.b16 %v97
    %v194 = vunpack.c.h.b16 %v97
    %v195 = vunpack.c.l.b16 %v98
    %v196 = vunpack.c.h.b16 %v98
    %v197 = vunpack.c.l.b16 %v99
    %v198 = vunpack.c.h.b16 %v99
    %v199 = vunpack.c.l.b16 %v100
    %v200 = vunpack.c.h.b16 %v100
    %v201 = vunpack.c.l.b16 %v101
    %v202 = vunpack.c.h.b16 %v101
    %v203 = vunpack.c.l.b16 %v102
    %v204 = vunpack.c.h.b16 %v102
    %v205 = vunpack.c.l.b16 %v103
    %v206 = vunpack.c.h.b16 %v103
    %v207 = vunpack.c.l.b16 %v104
    %v208 = vunpack.c.h.b16 %v104
    %v209 = vunpack.c.l.b16 %v105
    %v210 = vunpack.c.h.b16 %v105
    %v211 = vunpack.c.l.b16 %v106
    %v212 = vunpack.c.h.b16 %v106
    %v213 = vunpack.c.l.b16 %v107
    %v214 = vunpack.c.h.b16 %v107
    %v215 = vunpack.c.l.b16 %v108
    %v216 = vunpack.c.h.b16 %v108
    %v217 = vunpack.c.l.b16 %v109
    %v218 = vunpack.c.h.b16 %v109
    %v219 = vunpack.c.l.b16 %v110
    %v220 = vunpack.c.h.b16 %v110
    %v221 = vunpack.c.l.b16 %v111
    %v222 = vunpack.c.h.b16 %v111
    %v223 = vunpack.c.l.b16 %v112
    %v224 = vunpack.c.h.b16 %v112
    %v225 = vunpack.c.l.b16 %v113
    %v226 = vunpack.c.h.b16 %v113
    %v227 = vunpack.c.l.b16 %v114
    %v228 = vunpack.c.h.b16 %v114
    %v229 = vunpack.c.l.b16 %v115
    %v230 = vunpack.c.h.b16 %v115
    %v231 = vunpack.c.l.b16 %v116
    %v232 = vunpack.c.h.b16 %v116
    %v233 = vunpack.c.l.b16 %v117
    %v234 = vunpack.c.h.b16 %v117
    %v235 = vunpack.c.l.b16 %v118
    %v236 = vunpack.c.h.b16 %v118
    %v237 = vpack.c.b16 %v175, %v173
    %v238 = vpack.c.b16 %v176, %v174
    %v239 = vpack.c.b16 %v179, %v177
    %v240 = vpack.c.b16 %v180, %v178
    %v241 = vpack.c.b16 %v183, %v181
    %v242 = vpack.c.b16 %v184, %v182
    %v243 = vpack.c.b16 %v187, %v185
    %v244 = vpack.c.b16 %v188, %v186
    %v245 = vpack.c.b16 %v191, %v189
    %v246 = vpack.c.b16 %v192, %v190
    %v247 = vpack.c.b16 %v195, %v193
    %v248 = vpack.c.b16 %v196, %v194
    %v249 = vpack.c.b16 %v199, %v197
    %v250 = vpack.c.b16 %v200, %v198
    %v251 = vpack.c.b16 %v203, %v201
    %v252 = vpack.c.b16 %v204, %v202
    %v253 = vpack.c.b16 %v207, %v205
    %v254 = vpack.c.b16 %v208, %v206
    %v255 = vpack.c.b16 %v211, %v209
    %v256 = vpack.c.b16 %v212, %v210
    %v257 = vpack.c.b16 %v215, %v213
    %v258 = vpack.c.b16 %v216, %v214
    %v259 = vpack.c.b16 %v219, %v217
    %v260 = vpack.c.b16 %v220, %v218
    %v261 = vpack.c.b16 %v223, %v221
    %v262 = vpack.c.b16 %v224, %v222
    %v263 = vpack.c.b16 %v227, %v225
    %v264 = vpack.c.b16 %v228, %v226
    %v265 = vpack.c.b16 %v231, %v229
    %v266 = vpack.c.b16 %v232, %v230
    %v267 = vpack.c.b16 %v235, %v233
    %v268 = vpack.c.b16 %v236, %v234
    %301 = vmatprep.subr.bf16.mxu0 %v238
    %302 = vmatpush1.bf16.msra.mxu0 %v237
    %303 = vmatprep.subr.bf16.mxu0 %v240
    %304 = vmatpush1.bf16.msra.mxu0 %v239
    %305 = vmatprep.subr.bf16.mxu0 %v242
    %306 = vmatpush1.bf16.msra.mxu0 %v241
    %307 = vmatprep.subr.bf16.mxu0 %v244
    %308 = vmatpush1.bf16.msra.mxu0 %v243
    %309 = vmatprep.subr.bf16.mxu0 %v246
    %310 = vmatpush1.bf16.msra.mxu0 %v245
    %311 = vmatprep.subr.bf16.mxu0 %v248
    %312 = vmatpush1.bf16.msra.mxu0 %v247
    %313 = vmatprep.subr.bf16.mxu0 %v250
    %314 = vmatpush1.bf16.msra.mxu0 %v249
    %315 = vmatprep.subr.bf16.mxu0 %v252
    %316 = vmatpush1.bf16.msra.mxu0 %v251
    %317 = vmatprep.subr.bf16.mxu0 %v254
    %318 = vmatpush1.bf16.msra.mxu0 %v253
    %319 = vmatprep.subr.bf16.mxu0 %v256
    %320 = vmatpush1.bf16.msra.mxu0 %v255
    %321 = vmatprep.subr.bf16.mxu0 %v258
    %322 = vmatpush1.bf16.msra.mxu0 %v257
    %323 = vmatprep.subr.bf16.mxu0 %v260
    %324 = vmatpush1.bf16.msra.mxu0 %v259
    %325 = vmatprep.subr.bf16.mxu0 %v262
    %326 = vmatpush1.bf16.msra.mxu0 %v261
    %327 = vmatprep.subr.bf16.mxu0 %v264
    %328 = vmatpush1.bf16.msra.mxu0 %v263
    %329 = vmatprep.subr.bf16.mxu0 %v266
    %330 = vmatpush1.bf16.msra.mxu0 %v265
    %331 = vmatprep.subr.bf16.mxu0 %v268
    %332 = vmatpush1.bf16.msra.mxu0 %v267
    %333 = vmatprep.mubr.bf16.mxu0 %v138
    %334 = vmatmul.mubr.bf16.gmra.mrb[0].mxu0 %v137
    %v335 = vpop.f32.mrb[0].mxu0
    %v336 = vadd.f32 %v124, %v335
    %v337 = vpop.f32.mrb[0].mxu0
    %v338 = vadd.f32 %v128, %v337
    %v339 = vpop.f32.mrb[0].mxu0
    %v340 = vadd.f32 %v124, %v339
    %v341 = vpop.f32.mrb[0].mxu0
    %v342 = vadd.f32 %v128, %v341
    %343 = vdwg.mxu0
    %v344 = vmax.f32 %v336, 0.0
    %v345 = vmax.f32 %v338, 0.0
    %v346 = vmax.f32 %v340, 0.0
    %v347 = vmax.f32 %v342, 0.0
    %v348 = vpack.c.bf16 %v346, %v344
    %v349 = vpack.c.bf16 %v347, %v345
    %350 = vst [vmem:[#allocation10] sm:$0xff] %v344
    %351 = vst [vmem:[#allocation10 + $0x8] sm:$0xff] %v345
    %352 = vst [vmem:[#allocation10 + $0x10] sm:$0xff] %v346
    %353 = vst [vmem:[#allocation10 + $0x18] sm:$0xff] %v347
    %v354 = vld [vmem:[#allocation2] sm:$0xff]
    %v355 = vld [vmem:[#allocation2 + $0x8] sm:$0xff]
    %v356 = vld [vmem:[#allocation2 + $0x10] sm:$0xff]
    %v357 = vld [vmem:[#allocation2 + $0x18] sm:$0xff]
    %v358 = vld [vmem:[#allocation8] sm:$0xff]
    %v359 = vld [vmem:[#allocation8 + $0x8] sm:$0xff]
    %v360 = vld [vmem:[#allocation8 + $0x10] sm:$0xff]
    %v361 = vld [vmem:[#allocation8 + $0x18] sm:$0xff]
    %v362 = vld [vmem:[#allocation8 + $0x20] sm:$0xff]
    %v363 = vld [vmem:[#allocation8 + $0x28] sm:$0xff]
    %v364 = vld [vmem:[#allocation8 + $0x30] sm:$0xff]
    %v365 = vld [vmem:[#allocation8 + $0x38] sm:$0xff]
    %v366 = vld [vmem:[#allocation8 + $0x40] sm:$0xff]
    %v367 = vld [vmem:[#allocation8 + $0x48] sm:$0xff]
    %v368 = vld [vmem:[#allocation8 + $0x50] sm:$0xff]
    %v369 = vld [vmem:[#allocation8 + $0x58] sm:$0xff]
    %v370 = vld [vmem:[#allocation8 + $0x60] sm:$0xff]
    %v371 = vld [vmem:[#allocation8 + $0x68] sm:$0xff]
    %v372 = vld [vmem:[#allocation8 + $0x70] sm:$0xff]
    %v373 = vld [vmem:[#allocation8 + $0x78] sm:$0xff]
    %v374 = vld [vmem:[#allocation8 + $0x80] sm:$0xff]
    %v375 = vld [vmem:[#allocation8 + $0x88] sm:$0xff]
    %v376 = vld [vmem:[#allocation8 + $0x90] sm:$0xff]
    %v377 = vld [vmem:[#allocation8 + $0x98] sm:$0xff]
    %v378 = vld [vmem:[#allocation8 + $0xa0] sm:$0xff]
    %v379 = vld [vmem:[#allocation8 + $0xa8] sm:$0xff]
    %v380 = vld [vmem:[#allocation8 + $0xb0] sm:$0xff]
    %v381 = vld [vmem:[#allocation8 + $0xb8] sm:$0xff]
    %v382 = vld [vmem:[#allocation8 + $0xc0] sm:$0xff]
    %v383 = vld [vmem:[#allocation8 + $0xc8] sm:$0xff]
    %v384 = vld [vmem:[#allocation8 + $0xd0] sm:$0xff]
    %v385 = vld [vmem:[#allocation8 + $0xd8] sm:$0xff]
    %v386 = vld [vmem:[#allocation8 + $0xe0] sm:$0xff]
    %v387 = vld [vmem:[#allocation8 + $0xe8] sm:$0xff]
    %v388 = vld [vmem:[#allocation8 + $0xf0] sm:$0xff]
    %v389 = vld [vmem:[#allocation8 + $0xf8] sm:$0xff]
    %v422 = vunpack.c.l.b16 %v358
    %v423 = vunpack.c.h.b16 %v358
    %v424 = vunpack.c.l.b16 %v359
    %v425 = vunpack.c.h.b16 %v359
    %v426 = vunpack.c.l.b16 %v360
    %v427 = vunpack.c.h.b16 %v360
    %v428 = vunpack.c.l.b16 %v361
    %v429 = vunpack.c.h.b16 %v361
    %v430 = vunpack.c.l.b16 %v362
    %v431 = vunpack.c.h.b16 %v362
    %v432 = vunpack.c.l.b16 %v363
    %v433 = vunpack.c.h.b16 %v363
    %v434 = vunpack.c.l.b16 %v364
    %v435 = vunpack.c.h.b16 %v364
    %v436 = vunpack.c.l.b16 %v365
    %v437 = vunpack.c.h.b16 %v365
    %v438 = vunpack.c.l.b16 %v366
    %v439 = vunpack.c.h.b16 %v366
    %v440 = vunpack.c.l.b16 %v367
    %v441 = vunpack.c.h.b16 %v367
    %v442 = vunpack.c.l.b16 %v368
    %v443 = vunpack.c.h.b16 %v368
    %v444 = vunpack.c.l.b16 %v369
    %v445 = vunpack.c.h.b16 %v369
    %v446 = vunpack.c.l.b16 %v370
    %v447 = vunpack.c.h.b16 %v370
    %v448 = vunpack.c.l.b16 %v371
    %v449 = vunpack.c.h.b16 %v371
    %v450 = vunpack.c.l.b16 %v372
    %v451 = vunpack.c.h.b16 %v372
    %v452 = vunpack.c.l.b16 %v373
    %v453 = vunpack.c.h.b16 %v373
    %v454 = vunpack.c.l.b16 %v374
    %v455 = vunpack.c.h.b16 %v374
    %v456 = vunpack.c.l.b16 %v375
    %v457 = vunpack.c.h.b16 %v375
    %v458 = vunpack.c.l.b16 %v376
    %v459 = vunpack.c.h.b16 %v376
    %v460 = vunpack.c.l.b16 %v377
    %v461 = vunpack.c.h.b16 %v377
    %v462 = vunpack.c.l.b16 %v378
    %v463 = vunpack.c.h.b16 %v378
    %v464 = vunpack.c.l.b16 %v379
    %v465 = vunpack.c.h.b16 %v379
    %v466 = vunpack.c.l.b16 %v380
    %v467 = vunpack.c.h.b16 %v380
    %v468 = vunpack.c.l.b16 %v381
    %v469 = vunpack.c.h.b16 %v381
    %v470 = vunpack.c.l.b16 %v382
    %v471 = vunpack.c.h.b16 %v382
    %v472 = vunpack.c.l.b16 %v383
    %v473 = vunpack.c.h.b16 %v383
    %v474 = vunpack.c.l.b16 %v384
    %v475 = vunpack.c.h.b16 %v384
    %v476 = vunpack.c.l.b16 %v385
    %v477 = vunpack.c.h.b16 %v385
    %v478 = vunpack.c.l.b16 %v386
    %v479 = vunpack.c.h.b16 %v386
    %v480 = vunpack.c.l.b16 %v387
    %v481 = vunpack.c.h.b16 %v387
    %v482 = vunpack.c.l.b16 %v388
    %v483 = vunpack.c.h.b16 %v388
    %v484 = vunpack.c.l.b16 %v389
    %v485 = vunpack.c.h.b16 %v389
    %v486 = vpack.c.b16 %v424, %v422
    %v487 = vpack.c.b16 %v425, %v423
    %v488 = vpack.c.b16 %v428, %v426
    %v489 = vpack.c.b16 %v429, %v427
    %v490 = vpack.c.b16 %v432, %v430
    %v491 = vpack.c.b16 %v433, %v431
    %v492 = vpack.c.b16 %v436, %v434
    %v493 = vpack.c.b16 %v437, %v435
    %v494 = vpack.c.b16 %v440, %v438
    %v495 = vpack.c.b16 %v441, %v439
    %v496 = vpack.c.b16 %v444, %v442
    %v497 = vpack.c.b16 %v445, %v443
    %v498 = vpack.c.b16 %v448, %v446
    %v499 = vpack.c.b16 %v449, %v447
    %v500 = vpack.c.b16 %v452, %v450
    %v501 = vpack.c.b16 %v453, %v451
    %v502 = vpack.c.b16 %v456, %v454
    %v503 = vpack.c.b16 %v457, %v455
    %v504 = vpack.c.b16 %v460, %v458
    %v505 = vpack.c.b16 %v461, %v459
    %v506 = vpack.c.b16 %v464, %v462
    %v507 = vpack.c.b16 %v465, %v463
    %v508 = vpack.c.b16 %v468, %v466
    %v509 = vpack.c.b16 %v469, %v467
    %v510 = vpack.c.b16 %v472, %v470
    %v511 = vpack.c.b16 %v473, %v471
    %v512 = vpack.c.b16 %v476, %v474
    %v513 = vpack.c.b16 %v477, %v475
    %v514 = vpack.c.b16 %v480, %v478
    %v515 = vpack.c.b16 %v481, %v479
    %v516 = vpack.c.b16 %v484, %v482
    %v517 = vpack.c.b16 %v485, %v483
    %550 = vmatprep.subr.bf16.mxu0 %v487
    %551 = vmatpush1.bf16.msra.mxu0 %v486
    %552 = vmatprep.subr.bf16.mxu0 %v489
    %553 = vmatpush1.bf16.msra.mxu0 %v488
    %554 = vmatprep.subr.bf16.mxu0 %v491
    %555 = vmatpush1.bf16.msra.mxu0 %v490
    %556 = vmatprep.subr.bf16.mxu0 %v493
    %557 = vmatpush1.bf16.msra.mxu0 %v492
    %558 = vmatprep.subr.bf16.mxu0 %v495
    %559 = vmatpush1.bf16.msra.mxu0 %v494
    %560 = vmatprep.subr.bf16.mxu0 %v497
    %561 = vmatpush1.bf16.msra.mxu0 %v496
    %562 = vmatprep.subr.bf16.mxu0 %v499
    %563 = vmatpush1.bf16.msra.mxu0 %v498
    %564 = vmatprep.subr.bf16.mxu0 %v501
    %565 = vmatpush1.bf16.msra.mxu0 %v500
    %566 = vmatprep.subr.bf16.mxu0 %v503
    %567 = vmatpush1.bf16.msra.mxu0 %v502
    %568 = vmatprep.subr.bf16.mxu0 %v505
    %569 = vmatpush1.bf16.msra.mxu0 %v504
    %570 = vmatprep.subr.bf16.mxu0 %v507
    %571 = vmatpush1.bf16.msra.mxu0 %v506
    %572 = vmatprep.subr.bf16.mxu0 %v509
    %573 = vmatpush1.bf16.msra.mxu0 %v508
    %574 = vmatprep.subr.bf16.mxu0 %v511
    %575 = vmatpush1.bf16.msra.mxu0 %v510
    %576 = vmatprep.subr.bf16.mxu0 %v513
    %577 = vmatpush1.bf16.msra.mxu0 %v512
    %578 = vmatprep.subr.bf16.mxu0 %v515
    %579 = vmatpush1.bf16.msra.mxu0 %v514
    %580 = vmatprep.subr.bf16.mxu0 %v517
    %581 = vmatpush1.bf16.msra.mxu0 %v516
    %582 = vmatprep.mubr.bf16.mxu0 %v349
    %583 = vmatmul.mubr.bf16.gmra.mrb[0].mxu0 %v348
    %v584 = vpop.f32.mrb[0].mxu0
    %v585 = vadd.f32 0.0, %v584
    %v586 = vpop.f32.mrb[0].mxu0
    %v587 = vadd.f32 0.0, %v586
    %v588 = vpop.f32.mrb[0].mxu0
    %v589 = vadd.f32 0.0, %v588
    %v590 = vpop.f32.mrb[0].mxu0
    %v591 = vadd.f32 0.0, %v590
    %592 = vdwg.mxu0
    %v593 = vadd.f32 %v354, %v585
    %v594 = vadd.f32 %v355, %v587
    %v595 = vadd.f32 %v356, %v589
    %v596 = vadd.f32 %v357, %v591
    %597 = vst [vmem:[#allocation2] sm:$0xff] %v593
    %598 = vst [vmem:[#allocation2 + $0x8] sm:$0xff] %v594
    %599 = vst [vmem:[#allocation2 + $0x10] sm:$0xff] %v595
    %600 = vst [vmem:[#allocation2 + $0x18] sm:$0xff] %v596
    // Predicated region
    $region38: #{tpu_custom_call.1} parent=1 // pred_check
      %p601 = pneg %p65
    $region39: #{tpu_custom_call.1} parent=1 // pred_check_branch
      %603 = sbr.rel (%p601) target = $region41
    $region40: #{tpu_custom_call.1} parent=1 // pred_region
      %v604 = vld [vmem:[#allocation2] sm:$0xff]
      %v605 = vld [vmem:[#allocation2 + $0x8] sm:$0xff]
      %v606 = vld [vmem:[#allocation2 + $0x10] sm:$0xff]
      %v607 = vld [vmem:[#allocation2 + $0x18] sm:$0xff]
      %608 = vst [vmem:[#allocation9] sm:$0xff] %v604
      %609 = vst [vmem:[#allocation9 + $0x8] sm:$0xff] %v605
      %610 = vst [vmem:[#allocation9 + $0x10] sm:$0xff] %v606
      %611 = vst [vmem:[#allocation9 + $0x18] sm:$0xff] %v607
    $region41: #{tpu_custom_call.1} parent=1 // pred_fallthru
      _
    // Predicated region
    $region42: #{tpu_custom_call.1} parent=1 // pred_check
      _
    $region43: #{tpu_custom_call.1} parent=1 // pred_check_branch
      %613 = sbr.rel (0) target = $region45
    $region44: #{tpu_custom_call.1} parent=1 // pred_region
      %s615 = ssub.s32 512, 512
      %616 = vsyncadd [#allocation5], %s615
      %s617 = sshll.u32 [#allocation9], 4
      %s618 = int_to_ptr.vmem [resolvable:$true] %s617
      %623 = dma.vmem_to_hbm [thread:$0]  %s618, 512, %s5, [#allocation5], 256, 256, 16
    $region45: #{tpu_custom_call.1} parent=1 // pred_fallthru
      _
    // Predicated region
    $region46: #{tpu_custom_call.1} parent=1 // pred_check
      _
    $region47: #{tpu_custom_call.1} parent=1 // pred_check_branch
      %625 = sbr.rel (0) target = $region49
    $region48: #{tpu_custom_call.1} parent=1 // pred_region
      %s627 = ssub.s32 512, 512
      %628 = vsyncadd [#allocation11], %s627
      %s629 = sshll.u32 [#allocation10], 4
      %s630 = int_to_ptr.vmem [resolvable:$true] %s629
      %635 = dma.vmem_to_hbm [thread:$0]  %s630, 512, %s6, [#allocation11], 256, 256, 16
    $region49: #{tpu_custom_call.1} parent=1 // pred_fallthru
      _
    // Predicated region
    $region50: #{tpu_custom_call.1} parent=1 // pred_check
      _
    $region51: #{tpu_custom_call.1} parent=1 // pred_check_branch
      %637 = sbr.rel (0) target = $region53
    $region52: #{tpu_custom_call.1} parent=1 // pred_region
      %638 = dma.done [#allocation5], 512
    $region53: #{tpu_custom_call.1} parent=1 // pred_fallthru
      _
    // Predicated region
    $region54: #{tpu_custom_call.1} parent=1 // pred_check
      _
    $region55: #{tpu_custom_call.1} parent=1 // pred_check_branch
      %640 = sbr.rel (0) target = $region57
    $region56: #{tpu_custom_call.1} parent=1 // pred_region
      %641 = dma.done [#allocation11], 512
    $region57: #{tpu_custom_call.1} parent=1 // pred_fallthru
      _
    %642 = vsyncpa [#allocation4], 1
    %643 = vsyncpa [#allocation7], 1
    %644 = vsyncpa [#allocation5], 1
    %645 = vsyncpa [#allocation11], 1

</llo_original>
